<compile_context>
chip_gen: v6e
topology: v6e:2x2x1
jax: 0.10.0
libtpu: 0.0.40
codegen_flags: <defaults>
</compile_context>

<pallas_src>
import math

import jax
import jax.numpy as jnp
from jax.experimental import pallas as pl
from jax.experimental.pallas import tpu as pltpu


def _round_up(x, m):
    return ((x + m - 1) // m) * m


def _pick_tile(padded_dim, pref, unit):
    """Largest multiple of `unit` that divides `padded_dim` and is <= pref."""
    t = min(pref, padded_dim)
    t = max((t // unit) * unit, unit)
    while padded_dim % t != 0:
        t -= unit
    return t


def complex_linear_kernel(xr_ref, xi_ref, wre_ref, wim_ref, br_ref, bi_ref,
                          or_ref, oi_ref):
    k = pl.program_id(2)

    @pl.when(k == 0)
    def _():
        # Output blocks stay VMEM-resident across the k axis (index_map ignores
        # k); seed them with the broadcast bias and accumulate in place (f32).
        or_ref[...] = jnp.broadcast_to(br_ref[...], or_ref.shape)
        oi_ref[...] = jnp.broadcast_to(bi_ref[...], oi_ref.shape)

    xr = xr_ref[...]
    xi = xi_ref[...]
    wre = wre_ref[...]
    wim = wim_ref[...]
    # Complex product, F.linear semantics (no conjugate): 4 real MXU matmuls.
    or_ref[...] += (jnp.dot(xr, wre, preferred_element_type=jnp.float32)
                    - jnp.dot(xi, wim, preferred_element_type=jnp.float32))
    oi_ref[...] += (jnp.dot(xr, wim, preferred_element_type=jnp.float32)
                    + jnp.dot(xi, wre, preferred_element_type=jnp.float32))


def prepare_complex_linear_params(w_re, w_im, b_re, b_im):
    """One-time weight prep (outside the hot path).

    w_*: (N, K) float32 (PyTorch (out, in) layout), b_*: (N,) float32.
    Pre-transposes to (K, N) and zero-pads K/N to multiples of 128 so the
    forward pass never touches the weights before launching the kernel.
    """
    N, K = w_re.shape
    Kp = _round_up(K, 128)
    Np = _round_up(N, 128)
    wre_t = jnp.pad(w_re.T.astype(jnp.float32), ((0, Kp - K), (0, Np - N)))
    wim_t = jnp.pad(w_im.T.astype(jnp.float32), ((0, Kp - K), (0, Np - N)))
    br = jnp.pad(b_re.astype(jnp.float32).reshape(1, -1), ((0, 0), (0, Np - N)))
    bi = jnp.pad(b_im.astype(jnp.float32).reshape(1, -1), ((0, 0), (0, Np - N)))
    return {"wre_t": wre_t, "wim_t": wim_t, "br": br, "bi": bi, "n": N, "k": K}


def complex_linear(x_re, x_im, params, *, tm=512, tn=256, tk=512):
    """Pallas ComplexLinear forward.

    x_*: (M, K) float32; params from prepare_complex_linear_params().
    Returns (y_re, y_im), each (M, N) float32.
    """
    wre_t, wim_t = params["wre_t"], params["wim_t"]
    br, bi = params["br"], params["bi"]
    N, K = params["n"], params["k"]
    M, Kx = x_re.shape
    assert Kx == K, "input feature dim mismatch"
    Kp, Np = wre_t.shape  # already padded to multiples of 128 at prep time

    # Tile selection: (8,128)-aligned, dividing the padded dims.
    tm = min(tm, _round_up(M, 8))
    tn = _pick_tile(Np, tn, 128)
    tk = _pick_tile(Kp, tk, 128)
    Mp = _round_up(M, tm)

    # Keep >= 2 parallel blocks when batch gives only one M block (v7x dual-TC
    # / megacore sharding), as long as N allows it.
    if Mp // tm == 1 and Np // tn < 2 and Np // 128 >= 2:
        tn = _pick_tile(Np, Np // 2, 128)

    # Per-call input prep: pad x only when not already tile-aligned (zeros in
    # the contraction axis are benign).  Weights/bias were padded at prep time.
    if (Mp != M) or (Kp != K):
        x_re = jnp.pad(x_re, ((0, Mp - M), (0, Kp - K)))
        x_im = jnp.pad(x_im, ((0, Mp - M), (0, Kp - K)))

    grid = (Mp // tm, Np // tn, Kp // tk)

    cost = pl.CostEstimate(
        flops=8 * Mp * Np * Kp,  # 4 real matmuls
        transcendentals=0,
        bytes_accessed=4 * (2 * Mp * Kp + 2 * Kp * Np + 2 * Mp * Np + 2 * Np),
    )

    out_shape = (
        jax.ShapeDtypeStruct((Mp, Np), jnp.float32),
        jax.ShapeDtypeStruct((Mp, Np), jnp.float32),
    )

    y_re, y_im = pl.pallas_call(
        complex_linear_kernel,
        out_shape=out_shape,
        grid_spec=pltpu.PrefetchScalarGridSpec(
            num_scalar_prefetch=0,
            grid=grid,
            in_specs=[
                pl.BlockSpec((tm, tk), lambda i, j, k: (i, k)),   # x_re
                pl.BlockSpec((tm, tk), lambda i, j, k: (i, k)),   # x_im
                pl.BlockSpec((tk, tn), lambda i, j, k: (k, j)),   # W_re^T
                pl.BlockSpec((tk, tn), lambda i, j, k: (k, j)),   # W_im^T
                pl.BlockSpec((1, tn), lambda i, j, k: (0, j)),    # bias re
                pl.BlockSpec((1, tn), lambda i, j, k: (0, j)),    # bias im
            ],
            out_specs=[
                pl.BlockSpec((tm, tn), lambda i, j, k: (i, j)),   # y_re
                pl.BlockSpec((tm, tn), lambda i, j, k: (i, j)),   # y_im
            ],
        ),
        compiler_params=pltpu.CompilerParams(
            dimension_semantics=("parallel", "parallel", "arbitrary"),
            vmem_limit_bytes=32 * 1024 * 1024,
        ),
        cost_estimate=cost,
    )(x_re, x_im, wre_t, wim_t, br, bi)

    return y_re[:M, :N], y_im[:M, :N]


def init_complex_linear_params(key, in_features, out_features):
    """Deterministic re-implementation of ComplexLinear.reset_parameters().

    kaiming_uniform_(a=sqrt(5)) on a (out, in) matrix -> U(-1/sqrt(fan_in),
    1/sqrt(fan_in)); same bound for the bias."""
    k_wr, k_wi, k_br, k_bi = jax.random.split(key, 4)
    bound = 1.0 / math.sqrt(in_features)
    w_re = jax.random.uniform(k_wr, (out_features, in_features),
                              minval=-bound, maxval=bound, dtype=jnp.float32)
    w_im = jax.random.uniform(k_wi, (out_features, in_features),
                              minval=-bound, maxval=bound, dtype=jnp.float32)
    b_re = jax.random.uniform(k_br, (out_features,),
                              minval=-bound, maxval=bound, dtype=jnp.float32)
    b_im = jax.random.uniform(k_bi, (out_features,),
                              minval=-bound, maxval=bound, dtype=jnp.float32)
    return w_re, w_im, b_re, b_im


def _reference(x_re, x_im, w_re, w_im, b_re, b_im):
    """Plain-JAX F.linear semantics over complex (no conjugate), high precision."""
    hp = jax.lax.Precision.HIGHEST
    y_re = (jnp.dot(x_re, w_re.T, precision=hp)
            - jnp.dot(x_im, w_im.T, precision=hp) + b_re[None, :])
    y_im = (jnp.dot(x_re, w_im.T, precision=hp)
            + jnp.dot(x_im, w_re.T, precision=hp) + b_im[None, :])
    return y_re, y_im


if __name__ == "__main__":
    key = jax.random.PRNGKey(0)
    k_params, k_xr, k_xi, k2_params, k2_xr, k2_xi = jax.random.split(key, 6)

    # --- Test 1: module-sized small config (single block) ---
    batch, in_features, out_features = 8, 32, 32
    w_re, w_im, b_re, b_im = init_complex_linear_params(
        k_params, in_features, out_features)
    params = prepare_complex_linear_params(w_re, w_im, b_re, b_im)

    x_re = jax.random.normal(k_xr, (batch, in_features), dtype=jnp.float32)
    x_im = jax.random.normal(k_xi, (batch, in_features), dtype=jnp.float32)

    y_re, y_im = complex_linear(x_re, x_im, params)
    jax.block_until_ready((y_re, y_im))

    r_re, r_im = _reference(x_re, x_im, w_re, w_im, b_re, b_im)
    assert jnp.allclose(y_re, r_re, atol=1e-3, rtol=1e-3), "re mismatch (test 1)"
    assert jnp.allclose(y_im, r_im, atol=1e-3, rtol=1e-3), "im mismatch (test 1)"

    # --- Test 2: non-aligned shapes with small tiles to exercise the grid
    #     (multi-block M, N and K-reduction with padding) ---
    batch2, in2, out2 = 16, 192, 160
    w_re2, w_im2, b_re2, b_im2 = init_complex_linear_params(k2_params, in2, out2)
    params2 = prepare_complex_linear_params(w_re2, w_im2, b_re2, b_im2)

    x_re2 = jax.random.normal(k2_xr, (batch2, in2), dtype=jnp.float32)
    x_im2 = jax.random.normal(k2_xi, (batch2, in2), dtype=jnp.float32)

    y_re2, y_im2 = complex_linear(x_re2, x_im2, params2, tm=8, tn=128, tk=128)
    jax.block_until_ready((y_re2, y_im2))

    r_re2, r_im2 = _reference(x_re2, x_im2, w_re2, w_im2, b_re2, b_im2)
    assert jnp.allclose(y_re2, r_re2, atol=1e-3, rtol=1e-3), "re mismatch (test 2)"
    assert jnp.allclose(y_im2, r_im2, atol=1e-3, rtol=1e-3), "im mismatch (test 2)"

    print("KERNEL_OK")
</pallas_src>

<mosaic_0001>
module attributes {stable_mosaic.version = 11 : i64} {
  func.func @complex_linear_kernel(%arg0: i32, %arg1: i32, %arg2: i32, %arg3: memref<8x128xf32, #tpu.memory_space<vmem>>, %arg4: memref<8x128xf32, #tpu.memory_space<vmem>>, %arg5: memref<128x128xf32, #tpu.memory_space<vmem>>, %arg6: memref<128x128xf32, #tpu.memory_space<vmem>>, %arg7: memref<1x128xf32, #tpu.memory_space<vmem>>, %arg8: memref<1x128xf32, #tpu.memory_space<vmem>>, %arg9: memref<8x128xf32, #tpu.memory_space<vmem>>, %arg10: memref<8x128xf32, #tpu.memory_space<vmem>>) attributes {dimension_semantics = [#tpu.dimension_semantics<parallel>, #tpu.dimension_semantics<parallel>, #tpu.dimension_semantics<arbitrary>], iteration_bounds = array<i64: 1, 1, 1>, scalar_prefetch = 0 : i64, scratch_operands = 0 : i64, tpu.core_type = #tpu.core_type<tc>, window_params = [{transform_indices = @transform_0, window_bounds = array<i64: 8, 128>}, {transform_indices = @transform_1, window_bounds = array<i64: 8, 128>}, {transform_indices = @transform_2, window_bounds = array<i64: 128, 128>}, {transform_indices = @transform_3, window_bounds = array<i64: 128, 128>}, {transform_indices = @transform_4, window_bounds = array<i64: 1, 128>}, {transform_indices = @transform_5, window_bounds = array<i64: 1, 128>}, {transform_indices = @transform_6, window_bounds = array<i64: 8, 128>}, {transform_indices = @transform_7, window_bounds = array<i64: 8, 128>}]} {
    %c0_i32 = arith.constant 0 : i32
    %0 = arith.cmpi eq, %arg2, %c0_i32 : i32
    %1 = arith.extui %0 : i1 to i32
    %c0_i32_0 = arith.constant 0 : i32
    %2 = arith.cmpi ne, %1, %c0_i32_0 : i32
    scf.if %2 {
      %c0_19 = arith.constant 0 : index
      %c0_20 = arith.constant 0 : index
      %19 = vector.load %arg7[%c0_19, %c0_20] : memref<1x128xf32, #tpu.memory_space<vmem>>, vector<1x128xf32>
      %20 = vector.shape_cast %19 : vector<1x128xf32> to vector<1x128xf32>
      %21 = vector.broadcast %20 : vector<1x128xf32> to vector<8x128xf32>
      %c0_21 = arith.constant 0 : index
      %c0_22 = arith.constant 0 : index
      %22 = vector.load %arg9[%c0_21, %c0_22] : memref<8x128xf32, #tpu.memory_space<vmem>>, vector<8x128xf32>
      tpu.vector_store %arg9[%c0_21, %c0_22], %21 {strides = array<i32>} : memref<8x128xf32, #tpu.memory_space<vmem>>, vector<8x128xf32>,
      %c0_23 = arith.constant 0 : index
      %c0_24 = arith.constant 0 : index
      %23 = vector.load %arg8[%c0_23, %c0_24] : memref<1x128xf32, #tpu.memory_space<vmem>>, vector<1x128xf32>
      %24 = vector.shape_cast %23 : vector<1x128xf32> to vector<1x128xf32>
      %25 = vector.broadcast %24 : vector<1x128xf32> to vector<8x128xf32>
      %c0_25 = arith.constant 0 : index
      %c0_26 = arith.constant 0 : index
      %26 = vector.load %arg10[%c0_25, %c0_26] : memref<8x128xf32, #tpu.memory_space<vmem>>, vector<8x128xf32>
      tpu.vector_store %arg10[%c0_25, %c0_26], %25 {strides = array<i32>} : memref<8x128xf32, #tpu.memory_space<vmem>>, vector<8x128xf32>,
    } else {
    }
    %c0 = arith.constant 0 : index
    %c0_1 = arith.constant 0 : index
    %3 = vector.load %arg3[%c0, %c0_1] : memref<8x128xf32, #tpu.memory_space<vmem>>, vector<8x128xf32>
    %c0_2 = arith.constant 0 : index
    %c0_3 = arith.constant 0 : index
    %4 = vector.load %arg4[%c0_2, %c0_3] : memref<8x128xf32, #tpu.memory_space<vmem>>, vector<8x128xf32>
    %c0_4 = arith.constant 0 : index
    %c0_5 = arith.constant 0 : index
    %5 = vector.load %arg5[%c0_4, %c0_5] : memref<128x128xf32, #tpu.memory_space<vmem>>, vector<128x128xf32>
    %c0_6 = arith.constant 0 : index
    %c0_7 = arith.constant 0 : index
    %6 = vector.load %arg6[%c0_6, %c0_7] : memref<128x128xf32, #tpu.memory_space<vmem>>, vector<128x128xf32>
    %c0_8 = arith.constant 0 : index
    %c0_9 = arith.constant 0 : index
    %7 = vector.load %arg9[%c0_8, %c0_9] : memref<8x128xf32, #tpu.memory_space<vmem>>, vector<8x128xf32>
    %cst = arith.constant dense<0.000000e+00> : vector<8x128xf32>
    %8 = tpu.matmul %3, %5, %cst {dimension_numbers = #tpu.dot_dimension_numbers<[1], [0], [0], [1], [0, 0, 1, 1], [], []>} : vector<8x128xf32>, vector<128x128xf32>, vector<8x128xf32> -> vector<8x128xf32>
    %cst_10 = arith.constant dense<0.000000e+00> : vector<8x128xf32>
    %9 = tpu.matmul %4, %6, %cst_10 {dimension_numbers = #tpu.dot_dimension_numbers<[1], [0], [0], [1], [0, 0, 1, 1], [], []>} : vector<8x128xf32>, vector<128x128xf32>, vector<8x128xf32> -> vector<8x128xf32>
    %10 = arith.subf %8, %9 : vector<8x128xf32>
    %11 = arith.addf %7, %10 : vector<8x128xf32>
    %c0_11 = arith.constant 0 : index
    %c0_12 = arith.constant 0 : index
    %12 = vector.load %arg9[%c0_11, %c0_12] : memref<8x128xf32, #tpu.memory_space<vmem>>, vector<8x128xf32>
    tpu.vector_store %arg9[%c0_11, %c0_12], %11 {strides = array<i32>} : memref<8x128xf32, #tpu.memory_space<vmem>>, vector<8x128xf32>,
    %c0_13 = arith.constant 0 : index
    %c0_14 = arith.constant 0 : index
    %13 = vector.load %arg10[%c0_13, %c0_14] : memref<8x128xf32, #tpu.memory_space<vmem>>, vector<8x128xf32>
    %cst_15 = arith.constant dense<0.000000e+00> : vector<8x128xf32>
    %14 = tpu.matmul %3, %6, %cst_15 {dimension_numbers = #tpu.dot_dimension_numbers<[1], [0], [0], [1], [0, 0, 1, 1], [], []>} : vector<8x128xf32>, vector<128x128xf32>, vector<8x128xf32> -> vector<8x128xf32>
    %cst_16 = arith.constant dense<0.000000e+00> : vector<8x128xf32>
    %15 = tpu.matmul %4, %5, %cst_16 {dimension_numbers = #tpu.dot_dimension_numbers<[1], [0], [0], [1], [0, 0, 1, 1], [], []>} : vector<8x128xf32>, vector<128x128xf32>, vector<8x128xf32> -> vector<8x128xf32>
    %16 = arith.addf %14, %15 : vector<8x128xf32>
    %17 = arith.addf %13, %16 : vector<8x128xf32>
    %c0_17 = arith.constant 0 : index
    %c0_18 = arith.constant 0 : index
    %18 = vector.load %arg10[%c0_17, %c0_18] : memref<8x128xf32, #tpu.memory_space<vmem>>, vector<8x128xf32>
    tpu.vector_store %arg10[%c0_17, %c0_18], %17 {strides = array<i32>} : memref<8x128xf32, #tpu.memory_space<vmem>>, vector<8x128xf32>,
    return
  }
  func.func @transform_0(%arg0: i32, %arg1: i32, %arg2: i32) -> (i32, i32) {
    %c0_i32 = arith.constant 0 : i32
    return %arg0, %arg2 : i32, i32
  }
  func.func @transform_1(%arg0: i32, %arg1: i32, %arg2: i32) -> (i32, i32) {
    %c0_i32 = arith.constant 0 : i32
    return %arg0, %arg2 : i32, i32
  }
  func.func @transform_2(%arg0: i32, %arg1: i32, %arg2: i32) -> (i32, i32) {
    %c0_i32 = arith.constant 0 : i32
    return %arg2, %arg1 : i32, i32
  }
  func.func @transform_3(%arg0: i32, %arg1: i32, %arg2: i32) -> (i32, i32) {
    %c0_i32 = arith.constant 0 : i32
    return %arg2, %arg1 : i32, i32
  }
  func.func @transform_4(%arg0: i32, %arg1: i32, %arg2: i32) -> (i32, i32) {
    %c0_i32 = arith.constant 0 : i32
    %c0_i32_0 = arith.constant 0 : i32
    return %c0_i32, %arg1 : i32, i32
  }
  func.func @transform_5(%arg0: i32, %arg1: i32, %arg2: i32) -> (i32, i32) {
    %c0_i32 = arith.constant 0 : i32
    %c0_i32_0 = arith.constant 0 : i32
    return %c0_i32, %arg1 : i32, i32
  }
  func.func @transform_6(%arg0: i32, %arg1: i32, %arg2: i32) -> (i32, i32) {
    %c0_i32 = arith.constant 0 : i32
    return %arg0, %arg1 : i32, i32
  }
  func.func @transform_7(%arg0: i32, %arg1: i32, %arg2: i32) -> (i32, i32) {
    %c0_i32 = arith.constant 0 : i32
    return %arg0, %arg1 : i32, i32
  }
}

</mosaic_0001>

<llo_original>
// kernel: tpu_custom_call.1
$region0: #{tpu_custom_call.1}
  #allocation0 [shape = 'u32[]', space=smem, size = 0x4, offset = 0x4, fixed_abs, tag = 'smem constant byte address 0x4 - core index']
  #allocation1 [shape = 'u32[144,128]{1,0:T(1,128)}', space=vmem, size = 0x12000, scoped, tag = 'internal scratch']
  %s0 = inlined_call_operand.hbm [shape: f32[8,128], index: 0, kind: input, shape index: {}]
  %s1 = inlined_call_operand.hbm [shape: f32[8,128], index: 1, kind: input, shape index: {}]
  %s2 = inlined_call_operand.hbm [shape: f32[128,128], index: 2, kind: input, shape index: {}]
  %s3 = inlined_call_operand.hbm [shape: f32[128,128], index: 3, kind: input, shape index: {}]
  %s4 = inlined_call_operand.vmem [shape: f32[1,128], index: 4, kind: input, shape index: {}]
  %s5 = inlined_call_operand.vmem [shape: f32[1,128], index: 5, kind: input, shape index: {}]
  %s6 = inlined_call_operand.hbm [shape: f32[8,128], index: 6, kind: output, shape index: {0}]
  %s7 = inlined_call_operand.hbm [shape: f32[8,128], index: 7, kind: output, shape index: {1}]
  %8 = xla_tuple %s6, %s7
  %s9 = sld [smem:[#allocation0]]
  $region62: #{tpu_custom_call.1} parent=0
    _
  %s11 = ssub.s32 1, %s9
  %s12 = scalar_select 0, %s11, %s9
  $region1: #{tpu_custom_call.1} parent=0
    #allocation2 [shape = 'u8[4096]{0}', space=vmem, size = 0x1000, scoped, tag = 'input window, operand 0, single buffered']
    #allocation3 [shape = 's32[1]{0}', space=sflag, size = 0x4, scoped, tag = 'scoped memory for tpu_custom_call.1']
    #allocation4 [shape = 's32[1]{0}', space=sflag, size = 0x4, scoped, tag = 'scoped memory for tpu_custom_call.1']
    #allocation5 [shape = 'u8[4096]{0}', space=vmem, size = 0x1000, scoped, tag = 'input window, operand 1, single buffered']
    #allocation6 [shape = 's32[1]{0}', space=sflag, size = 0x4, scoped, tag = 'scoped memory for tpu_custom_call.1']
    #allocation7 [shape = 'u8[65536]{0}', space=vmem, size = 0x10000, scoped, tag = 'input window, operand 2, single buffered']
    #allocation8 [shape = 'u8[65536]{0}', space=vmem, size = 0x10000, scoped, tag = 'input window, operand 3, single buffered']
    #allocation9 [shape = 's32[1]{0}', space=sflag, size = 0x4, scoped, tag = 'scoped memory for tpu_custom_call.1']
    #allocation10 [shape = 'u8[4096]{0}', space=vmem, size = 0x1000, scoped, tag = 'output window, operand 0, single buffered']
    #allocation11 [shape = 'u8[4096]{0}', space=vmem, size = 0x1000, scoped, tag = 'output window, operand 1, single buffered']
    #allocation12 [shape = 's32[1]{0}', space=sflag, size = 0x4, scoped, tag = 'scoped memory for tpu_custom_call.1']
    %13 = vsyncpa [#allocation3], 0
    %14 = vsyncpa [#allocation6], 0
    %15 = vsyncpa [#allocation9], 0
    %16 = vsyncpa [#allocation4], 0
    %17 = vsyncpa [#allocation12], 0
    // Predicated region
    $region2: #{tpu_custom_call.1} parent=1 // pred_check
      _
    $region3: #{tpu_custom_call.1} parent=1 // pred_check_branch
      %19 = sbr.rel (0) target = $region5
    $region4: #{tpu_custom_call.1} parent=1 // pred_region
      %s21 = ssub.s32 128, 128
      %22 = vsyncadd [#allocation3], %s21
      %s24 = sshll.u32 [#allocation2], 4
      %s25 = int_to_ptr.vmem [resolvable:$true] %s24
      %27 = dma.hbm_to_vmem [thread:$0]  %s0, 128, %s25, [#allocation3]
    $region5: #{tpu_custom_call.1} parent=1 // pred_fallthru
      _
    // Predicated region
    $region6: #{tpu_custom_call.1} parent=1 // pred_check
      _
    $region7: #{tpu_custom_call.1} parent=1 // pred_check_branch
      %29 = sbr.rel (0) target = $region9
    $region8: #{tpu_custom_call.1} parent=1 // pred_region
      %s31 = ssub.s32 128, 128
      %32 = vsyncadd [#allocation6], %s31
      %s34 = sshll.u32 [#allocation5], 4
      %s35 = int_to_ptr.vmem [resolvable:$true] %s34
      %37 = dma.hbm_to_vmem [thread:$0]  %s1, 128, %s35, [#allocation6]
    $region9: #{tpu_custom_call.1} parent=1 // pred_fallthru
      _
    // Predicated region
    $region10: #{tpu_custom_call.1} parent=1 // pred_check
      _
    $region11: #{tpu_custom_call.1} parent=1 // pred_check_branch
      %39 = sbr.rel (0) target = $region13
    $region12: #{tpu_custom_call.1} parent=1 // pred_region
      %s41 = ssub.s32 2048, 2048
      %42 = vsyncadd [#allocation6], %s41
      %s43 = sshll.u32 [#allocation7], 4
      %s44 = int_to_ptr.vmem [resolvable:$true] %s43
      %49 = dma.hbm_to_vmem [thread:$0]  %s2, 2048, %s44, [#allocation6], 128, 128, 8
    $region13: #{tpu_custom_call.1} parent=1 // pred_fallthru
      _
    // Predicated region
    $region14: #{tpu_custom_call.1} parent=1 // pred_check
      _
    $region15: #{tpu_custom_call.1} parent=1 // pred_check_branch
      %51 = sbr.rel (0) target = $region17
    $region16: #{tpu_custom_call.1} parent=1 // pred_region
      %s53 = ssub.s32 2048, 2048
      %54 = vsyncadd [#allocation9], %s53
      %s55 = sshll.u32 [#allocation8], 4
      %s56 = int_to_ptr.vmem [resolvable:$true] %s55
      %61 = dma.hbm_to_vmem [thread:$0]  %s3, 2048, %s56, [#allocation9], 128, 128, 8
    $region17: #{tpu_custom_call.1} parent=1 // pred_fallthru
      _
    // Predicated region
    $region18: #{tpu_custom_call.1} parent=1 // pred_check
      _
    $region19: #{tpu_custom_call.1} parent=1 // pred_check_branch
      %63 = sbr.rel (0) target = $region21
    $region20: #{tpu_custom_call.1} parent=1 // pred_region
      _
    $region21: #{tpu_custom_call.1} parent=1 // pred_fallthru
      _
    // Predicated region
    $region22: #{tpu_custom_call.1} parent=1 // pred_check
      _
    $region23: #{tpu_custom_call.1} parent=1 // pred_check_branch
      %65 = sbr.rel (0) target = $region25
    $region24: #{tpu_custom_call.1} parent=1 // pred_region
      _
    $region25: #{tpu_custom_call.1} parent=1 // pred_fallthru
      _
    // Predicated region
    $region26: #{tpu_custom_call.1} parent=1 // pred_check
      _
    $region27: #{tpu_custom_call.1} parent=1 // pred_check_branch
      %67 = sbr.rel (0) target = $region29
    $region28: #{tpu_custom_call.1} parent=1 // pred_region
      %68 = dma.done [#allocation3], 128
    $region29: #{tpu_custom_call.1} parent=1 // pred_fallthru
      _
    // Predicated region
    $region30: #{tpu_custom_call.1} parent=1 // pred_check
      _
    $region31: #{tpu_custom_call.1} parent=1 // pred_check_branch
      %70 = sbr.rel (0) target = $region33
    $region32: #{tpu_custom_call.1} parent=1 // pred_region
      %71 = dma.done [#allocation6], 128
    $region33: #{tpu_custom_call.1} parent=1 // pred_fallthru
      _
    // Predicated region
    $region34: #{tpu_custom_call.1} parent=1 // pred_check
      _
    $region35: #{tpu_custom_call.1} parent=1 // pred_check_branch
      %73 = sbr.rel (0) target = $region37
    $region36: #{tpu_custom_call.1} parent=1 // pred_region
      %74 = dma.done [#allocation6], 2048
    $region37: #{tpu_custom_call.1} parent=1 // pred_fallthru
      _
    // Predicated region
    $region38: #{tpu_custom_call.1} parent=1 // pred_check
      _
    $region39: #{tpu_custom_call.1} parent=1 // pred_check_branch
      %76 = sbr.rel (0) target = $region41
    $region40: #{tpu_custom_call.1} parent=1 // pred_region
      %77 = dma.done [#allocation9], 2048
    $region41: #{tpu_custom_call.1} parent=1 // pred_fallthru
      _
    %p78 = scmp.eq.s32.totalorder 0, 0
    // Predicated region
    $region42: #{tpu_custom_call.1} parent=1 // pred_check
      %p79 = pneg %p78
    $region43: #{tpu_custom_call.1} parent=1 // pred_check_branch
      %81 = sbr.rel (%p79) target = $region45
    $region44: #{tpu_custom_call.1} parent=1 // pred_region
      %v82 = vld [vmem:[%s4] sm:$0x1]
      %v84 = vlaneseq
      %v85 = vshrl.u32 %v84, 7
      %v86 = vsub.s32 0, %v85
      %v87 = vrot.slane %v82, %v86
      %89 = vst [vmem:[#allocation10] sm:$0xff] %v87
      %v90 = vld [vmem:[%s5] sm:$0x1]
      %v92 = vlaneseq
      %v93 = vshrl.u32 %v92, 7
      %v94 = vsub.s32 0, %v93
      %v95 = vrot.slane %v90, %v94
      %97 = vst [vmem:[#allocation11] sm:$0xff] %v95
    $region45: #{tpu_custom_call.1} parent=1 // pred_fallthru
      _
    %v98 = vld [vmem:[#allocation2] sm:$0xff]
    %v99 = vld [vmem:[#allocation5] sm:$0xff]
    %v100 = vld [vmem:[#allocation7] sm:$0xff]
    %v101 = vld [vmem:[#allocation7 + $0x8] sm:$0xff]
    %v102 = vld [vmem:[#allocation7 + $0x10] sm:$0xff]
    %v103 = vld [vmem:[#allocation7 + $0x18] sm:$0xff]
    %v104 = vld [vmem:[#allocation7 + $0x20] sm:$0xff]
    %v105 = vld [vmem:[#allocation7 + $0x28] sm:$0xff]
    %v106 = vld [vmem:[#allocation7 + $0x30] sm:$0xff]
    %v107 = vld [vmem:[#allocation7 + $0x38] sm:$0xff]
    %v108 = vld [vmem:[#allocation7 + $0x40] sm:$0xff]
    %v109 = vld [vmem:[#allocation7 + $0x48] sm:$0xff]
    %v110 = vld [vmem:[#allocation7 + $0x50] sm:$0xff]
    %v111 = vld [vmem:[#allocation7 + $0x58] sm:$0xff]
    %v112 = vld [vmem:[#allocation7 + $0x60] sm:$0xff]
    %v113 = vld [vmem:[#allocation7 + $0x68] sm:$0xff]
    %v114 = vld [vmem:[#allocation7 + $0x70] sm:$0xff]
    %v115 = vld [vmem:[#allocation7 + $0x78] sm:$0xff]
    %v116 = vld [vmem:[#allocation8] sm:$0xff]
    %v117 = vld [vmem:[#allocation8 + $0x8] sm:$0xff]
    %v118 = vld [vmem:[#allocation8 + $0x10] sm:$0xff]
    %v119 = vld [vmem:[#allocation8 + $0x18] sm:$0xff]
    %v120 = vld [vmem:[#allocation8 + $0x20] sm:$0xff]
    %v121 = vld [vmem:[#allocation8 + $0x28] sm:$0xff]
    %v122 = vld [vmem:[#allocation8 + $0x30] sm:$0xff]
    %v123 = vld [vmem:[#allocation8 + $0x38] sm:$0xff]
    %v124 = vld [vmem:[#allocation8 + $0x40] sm:$0xff]
    %v125 = vld [vmem:[#allocation8 + $0x48] sm:$0xff]
    %v126 = vld [vmem:[#allocation8 + $0x50] sm:$0xff]
    %v127 = vld [vmem:[#allocation8 + $0x58] sm:$0xff]
    %v128 = vld [vmem:[#allocation8 + $0x60] sm:$0xff]
    %v129 = vld [vmem:[#allocation8 + $0x68] sm:$0xff]
    %v130 = vld [vmem:[#allocation8 + $0x70] sm:$0xff]
    %v131 = vld [vmem:[#allocation8 + $0x78] sm:$0xff]
    %v132 = vld [vmem:[#allocation10] sm:$0xff]
    %133 = vmatprep.subr.mxu0 0.0
    %134 = vmatpush1.msra.mxu0 %v115
    %135 = vmatprep.subr.mxu0 0.0
    %136 = vmatpush1.msra.mxu0 %v114
    %137 = vmatprep.subr.mxu0 0.0
    %138 = vmatpush1.msra.mxu0 %v113
    %139 = vmatprep.subr.mxu0 0.0
    %140 = vmatpush1.msra.mxu0 %v112
    %141 = vmatprep.subr.mxu0 0.0
    %142 = vmatpush1.msra.mxu0 %v111
    %143 = vmatprep.subr.mxu0 0.0
    %144 = vmatpush1.msra.mxu0 %v110
    %145 = vmatprep.subr.mxu0 0.0
    %146 = vmatpush1.msra.mxu0 %v109
    %147 = vmatprep.subr.mxu0 0.0
    %148 = vmatpush1.msra.mxu0 %v108
    %149 = vmatprep.subr.mxu0 0.0
    %150 = vmatpush1.msra.mxu0 %v107
    %151 = vmatprep.subr.mxu0 0.0
    %152 = vmatpush1.msra.mxu0 %v106
    %153 = vmatprep.subr.mxu0 0.0
    %154 = vmatpush1.msra.mxu0 %v105
    %155 = vmatprep.subr.mxu0 0.0
    %156 = vmatpush1.msra.mxu0 %v104
    %157 = vmatprep.subr.mxu0 0.0
    %158 = vmatpush1.msra.mxu0 %v103
    %159 = vmatprep.subr.mxu0 0.0
    %160 = vmatpush1.msra.mxu0 %v102
    %161 = vmatprep.subr.mxu0 0.0
    %162 = vmatpush1.msra.mxu0 %v101
    %163 = vmatprep.subr.mxu0 0.0
    %164 = vmatpush1.msra.mxu0 %v100
    %165 = vmatprep.subr.mxu0 0.0
    %166 = vmatpush2.msra.mxu0 0.0
    %167 = vmatprep.subr.mxu0 0.0
    %168 = vmatpush2.msra.mxu0 0.0
    %169 = vmatprep.subr.mxu0 0.0
    %170 = vmatpush2.msra.mxu0 0.0
    %171 = vmatprep.subr.mxu0 0.0
    %172 = vmatpush2.msra.mxu0 0.0
    %173 = vmatprep.subr.mxu0 0.0
    %174 = vmatpush2.msra.mxu0 0.0
    %175 = vmatprep.subr.mxu0 0.0
    %176 = vmatpush2.msra.mxu0 0.0
    %177 = vmatprep.subr.mxu0 0.0
    %178 = vmatpush2.msra.mxu0 0.0
    %179 = vmatprep.subr.mxu0 0.0
    %180 = vmatpush2.msra.mxu0 0.0
    %181 = vmatprep.subr.mxu0 0.0
    %182 = vmatpush2.msra.mxu0 0.0
    %183 = vmatprep.subr.mxu0 0.0
    %184 = vmatpush2.msra.mxu0 0.0
    %185 = vmatprep.subr.mxu0 0.0
    %186 = vmatpush2.msra.mxu0 0.0
    %187 = vmatprep.subr.mxu0 0.0
    %188 = vmatpush2.msra.mxu0 0.0
    %189 = vmatprep.subr.mxu0 0.0
    %190 = vmatpush2.msra.mxu0 0.0
    %191 = vmatprep.subr.mxu0 0.0
    %192 = vmatpush2.msra.mxu0 0.0
    %193 = vmatprep.subr.mxu0 0.0
    %194 = vmatpush2.msra.mxu0 0.0
    %195 = vmatprep.subr.mxu0 0.0
    %196 = vmatpush2.msra.mxu0 0.0
    %197 = vmatprep.mubr.f32.mxu0 0.0
    %198 = vmatmul.mubr.f32.gmra.mxu0 %v98
    %v199 = vpop.f32.mrf.mxu0
    %v200 = vadd.f32 0.0, %v199
    %v201 = vpop.f32.mrf.mxu0
    %202 = vdwg.mxu0
    %203 = vmatprep.subr.mxu0 0.0
    %204 = vmatpush1.msra.mxu0 %v131
    %205 = vmatprep.subr.mxu0 0.0
    %206 = vmatpush1.msra.mxu0 %v130
    %207 = vmatprep.subr.mxu0 0.0
    %208 = vmatpush1.msra.mxu0 %v129
    %209 = vmatprep.subr.mxu0 0.0
    %210 = vmatpush1.msra.mxu0 %v128
    %211 = vmatprep.subr.mxu0 0.0
    %212 = vmatpush1.msra.mxu0 %v127
    %213 = vmatprep.subr.mxu0 0.0
    %214 = vmatpush1.msra.mxu0 %v126
    %215 = vmatprep.subr.mxu0 0.0
    %216 = vmatpush1.msra.mxu0 %v125
    %217 = vmatprep.subr.mxu0 0.0
    %218 = vmatpush1.msra.mxu0 %v124
    %219 = vmatprep.subr.mxu0 0.0
    %220 = vmatpush1.msra.mxu0 %v123
    %221 = vmatprep.subr.mxu0 0.0
    %222 = vmatpush1.msra.mxu0 %v122
    %223 = vmatprep.subr.mxu0 0.0
    %224 = vmatpush1.msra.mxu0 %v121
    %225 = vmatprep.subr.mxu0 0.0
    %226 = vmatpush1.msra.mxu0 %v120
    %227 = vmatprep.subr.mxu0 0.0
    %228 = vmatpush1.msra.mxu0 %v119
    %229 = vmatprep.subr.mxu0 0.0
    %230 = vmatpush1.msra.mxu0 %v118
    %231 = vmatprep.subr.mxu0 0.0
    %232 = vmatpush1.msra.mxu0 %v117
    %233 = vmatprep.subr.mxu0 0.0
    %234 = vmatpush1.msra.mxu0 %v116
    %235 = vmatprep.subr.mxu0 0.0
    %236 = vmatpush2.msra.mxu0 0.0
    %237 = vmatprep.subr.mxu0 0.0
    %238 = vmatpush2.msra.mxu0 0.0
    %239 = vmatprep.subr.mxu0 0.0
    %240 = vmatpush2.msra.mxu0 0.0
    %241 = vmatprep.subr.mxu0 0.0
    %242 = vmatpush2.msra.mxu0 0.0
    %243 = vmatprep.subr.mxu0 0.0
    %244 = vmatpush2.msra.mxu0 0.0
    %245 = vmatprep.subr.mxu0 0.0
    %246 = vmatpush2.msra.mxu0 0.0
    %247 = vmatprep.subr.mxu0 0.0
    %248 = vmatpush2.msra.mxu0 0.0
    %249 = vmatprep.subr.mxu0 0.0
    %250 = vmatpush2.msra.mxu0 0.0
    %251 = vmatprep.subr.mxu0 0.0
    %252 = vmatpush2.msra.mxu0 0.0
    %253 = vmatprep.subr.mxu0 0.0
    %254 = vmatpush2.msra.mxu0 0.0
    %255 = vmatprep.subr.mxu0 0.0
    %256 = vmatpush2.msra.mxu0 0.0
    %257 = vmatprep.subr.mxu0 0.0
    %258 = vmatpush2.msra.mxu0 0.0
    %259 = vmatprep.subr.mxu0 0.0
    %260 = vmatpush2.msra.mxu0 0.0
    %261 = vmatprep.subr.mxu0 0.0
    %262 = vmatpush2.msra.mxu0 0.0
    %263 = vmatprep.subr.mxu0 0.0
    %264 = vmatpush2.msra.mxu0 0.0
    %265 = vmatprep.subr.mxu0 0.0
    %266 = vmatpush2.msra.mxu0 0.0
    %267 = vmatprep.mubr.f32.mxu0 0.0
    %268 = vmatmul.mubr.f32.gmra.mxu0 %v99
    %v269 = vpop.f32.mrf.mxu0
    %v270 = vadd.f32 0.0, %v269
    %v271 = vpop.f32.mrf.mxu0
    %272 = vdwg.mxu0
    %v273 = vsub.f32 %v200, %v270
    %v274 = vadd.f32 %v132, %v273
    %275 = vst [vmem:[#allocation10] sm:$0xff] %v274
    %v276 = vld [vmem:[#allocation11] sm:$0xff]
    %277 = vmatprep.subr.mxu0 0.0
    %278 = vmatpush1.msra.mxu0 %v115
    %279 = vmatprep.subr.mxu0 0.0
    %280 = vmatpush1.msra.mxu0 %v114
    %281 = vmatprep.subr.mxu0 0.0
    %282 = vmatpush1.msra.mxu0 %v113
    %283 = vmatprep.subr.mxu0 0.0
    %284 = vmatpush1.msra.mxu0 %v112
    %285 = vmatprep.subr.mxu0 0.0
    %286 = vmatpush1.msra.mxu0 %v111
    %287 = vmatprep.subr.mxu0 0.0
    %288 = vmatpush1.msra.mxu0 %v110
    %289 = vmatprep.subr.mxu0 0.0
    %290 = vmatpush1.msra.mxu0 %v109
    %291 = vmatprep.subr.mxu0 0.0
    %292 = vmatpush1.msra.mxu0 %v108
    %293 = vmatprep.subr.mxu0 0.0
    %294 = vmatpush1.msra.mxu0 %v107
    %295 = vmatprep.subr.mxu0 0.0
    %296 = vmatpush1.msra.mxu0 %v106
    %297 = vmatprep.subr.mxu0 0.0
    %298 = vmatpush1.msra.mxu0 %v105
    %299 = vmatprep.subr.mxu0 0.0
    %300 = vmatpush1.msra.mxu0 %v104
    %301 = vmatprep.subr.mxu0 0.0
    %302 = vmatpush1.msra.mxu0 %v103
    %303 = vmatprep.subr.mxu0 0.0
    %304 = vmatpush1.msra.mxu0 %v102
    %305 = vmatprep.subr.mxu0 0.0
    %306 = vmatpush1.msra.mxu0 %v101
    %307 = vmatprep.subr.mxu0 0.0
    %308 = vmatpush1.msra.mxu0 %v100
    %309 = vmatprep.subr.mxu0 0.0
    %310 = vmatpush2.msra.mxu0 0.0
    %311 = vmatprep.subr.mxu0 0.0
    %312 = vmatpush2.msra.mxu0 0.0
    %313 = vmatprep.subr.mxu0 0.0
    %314 = vmatpush2.msra.mxu0 0.0
    %315 = vmatprep.subr.mxu0 0.0
    %316 = vmatpush2.msra.mxu0 0.0
    %317 = vmatprep.subr.mxu0 0.0
    %318 = vmatpush2.msra.mxu0 0.0
    %319 = vmatprep.subr.mxu0 0.0
    %320 = vmatpush2.msra.mxu0 0.0
    %321 = vmatprep.subr.mxu0 0.0
    %322 = vmatpush2.msra.mxu0 0.0
    %323 = vmatprep.subr.mxu0 0.0
    %324 = vmatpush2.msra.mxu0 0.0
    %325 = vmatprep.subr.mxu0 0.0
    %326 = vmatpush2.msra.mxu0 0.0
    %327 = vmatprep.subr.mxu0 0.0
    %328 = vmatpush2.msra.mxu0 0.0
    %329 = vmatprep.subr.mxu0 0.0
    %330 = vmatpush2.msra.mxu0 0.0
    %331 = vmatprep.subr.mxu0 0.0
    %332 = vmatpush2.msra.mxu0 0.0
    %333 = vmatprep.subr.mxu0 0.0
    %334 = vmatpush2.msra.mxu0 0.0
    %335 = vmatprep.subr.mxu0 0.0
    %336 = vmatpush2.msra.mxu0 0.0
    %337 = vmatprep.subr.mxu0 0.0
    %338 = vmatpush2.msra.mxu0 0.0
    %339 = vmatprep.subr.mxu0 0.0
    %340 = vmatpush2.msra.mxu0 0.0
    %341 = vmatprep.mubr.f32.mxu0 0.0
    %342 = vmatmul.mubr.f32.gmra.mxu0 %v99
    %v343 = vpop.f32.mrf.mxu0
    %v344 = vadd.f32 0.0, %v343
    %v345 = vpop.f32.mrf.mxu0
    %346 = vdwg.mxu0
    %347 = vmatprep.subr.mxu0 0.0
    %348 = vmatpush1.msra.mxu0 %v131
    %349 = vmatprep.subr.mxu0 0.0
    %350 = vmatpush1.msra.mxu0 %v130
    %351 = vmatprep.subr.mxu0 0.0
    %352 = vmatpush1.msra.mxu0 %v129
    %353 = vmatprep.subr.mxu0 0.0
    %354 = vmatpush1.msra.mxu0 %v128
    %355 = vmatprep.subr.mxu0 0.0
    %356 = vmatpush1.msra.mxu0 %v127
    %357 = vmatprep.subr.mxu0 0.0
    %358 = vmatpush1.msra.mxu0 %v126
    %359 = vmatprep.subr.mxu0 0.0
    %360 = vmatpush1.msra.mxu0 %v125
    %361 = vmatprep.subr.mxu0 0.0
    %362 = vmatpush1.msra.mxu0 %v124
    %363 = vmatprep.subr.mxu0 0.0
    %364 = vmatpush1.msra.mxu0 %v123
    %365 = vmatprep.subr.mxu0 0.0
    %366 = vmatpush1.msra.mxu0 %v122
    %367 = vmatprep.subr.mxu0 0.0
    %368 = vmatpush1.msra.mxu0 %v121
    %369 = vmatprep.subr.mxu0 0.0
    %370 = vmatpush1.msra.mxu0 %v120
    %371 = vmatprep.subr.mxu0 0.0
    %372 = vmatpush1.msra.mxu0 %v119
    %373 = vmatprep.subr.mxu0 0.0
    %374 = vmatpush1.msra.mxu0 %v118
    %375 = vmatprep.subr.mxu0 0.0
    %376 = vmatpush1.msra.mxu0 %v117
    %377 = vmatprep.subr.mxu0 0.0
    %378 = vmatpush1.msra.mxu0 %v116
    %379 = vmatprep.subr.mxu0 0.0
    %380 = vmatpush2.msra.mxu0 0.0
    %381 = vmatprep.subr.mxu0 0.0
    %382 = vmatpush2.msra.mxu0 0.0
    %383 = vmatprep.subr.mxu0 0.0
    %384 = vmatpush2.msra.mxu0 0.0
    %385 = vmatprep.subr.mxu0 0.0
    %386 = vmatpush2.msra.mxu0 0.0
    %387 = vmatprep.subr.mxu0 0.0
    %388 = vmatpush2.msra.mxu0 0.0
    %389 = vmatprep.subr.mxu0 0.0
    %390 = vmatpush2.msra.mxu0 0.0
    %391 = vmatprep.subr.mxu0 0.0
    %392 = vmatpush2.msra.mxu0 0.0
    %393 = vmatprep.subr.mxu0 0.0
    %394 = vmatpush2.msra.mxu0 0.0
    %395 = vmatprep.subr.mxu0 0.0
    %396 = vmatpush2.msra.mxu0 0.0
    %397 = vmatprep.subr.mxu0 0.0
    %398 = vmatpush2.msra.mxu0 0.0
    %399 = vmatprep.subr.mxu0 0.0
    %400 = vmatpush2.msra.mxu0 0.0
    %401 = vmatprep.subr.mxu0 0.0
    %402 = vmatpush2.msra.mxu0 0.0
    %403 = vmatprep.subr.mxu0 0.0
    %404 = vmatpush2.msra.mxu0 0.0
    %405 = vmatprep.subr.mxu0 0.0
    %406 = vmatpush2.msra.mxu0 0.0
    %407 = vmatprep.subr.mxu0 0.0
    %408 = vmatpush2.msra.mxu0 0.0
    %409 = vmatprep.subr.mxu0 0.0
    %410 = vmatpush2.msra.mxu0 0.0
    %411 = vmatprep.mubr.f32.mxu0 0.0
    %412 = vmatmul.mubr.f32.gmra.mxu0 %v98
    %v413 = vpop.f32.mrf.mxu0
    %v414 = vadd.f32 %v344, %v413
    %v415 = vpop.f32.mrf.mxu0
    %416 = vdwg.mxu0
    %v417 = vadd.f32 %v276, %v414
    %418 = vst [vmem:[#allocation11] sm:$0xff] %v417
    // Predicated region
    $region46: #{tpu_custom_call.1} parent=1 // pred_check
      _
    $region47: #{tpu_custom_call.1} parent=1 // pred_check_branch
      %420 = sbr.rel (0) target = $region49
    $region48: #{tpu_custom_call.1} parent=1 // pred_region
      %s422 = ssub.s32 128, 128
      %423 = vsyncadd [#allocation4], %s422
      %s425 = sshll.u32 [#allocation10], 4
      %s426 = int_to_ptr.vmem [resolvable:$true] %s425
      %428 = dma.vmem_to_hbm [thread:$0]  %s426, 128, %s6, [#allocation4]
    $region49: #{tpu_custom_call.1} parent=1 // pred_fallthru
      _
    // Predicated region
    $region50: #{tpu_custom_call.1} parent=1 // pred_check
      _
    $region51: #{tpu_custom_call.1} parent=1 // pred_check_branch
      %430 = sbr.rel (0) target = $region53
    $region52: #{tpu_custom_call.1} parent=1 // pred_region
      %s432 = ssub.s32 128, 128
      %433 = vsyncadd [#allocation12], %s432
      %s435 = sshll.u32 [#allocation11], 4
      %s436 = int_to_ptr.vmem [resolvable:$true] %s435
      %438 = dma.vmem_to_hbm [thread:$0]  %s436, 128, %s7, [#allocation12]
    $region53: #{tpu_custom_call.1} parent=1 // pred_fallthru
      _
    // Predicated region
    $region54: #{tpu_custom_call.1} parent=1 // pred_check
      _
    $region55: #{tpu_custom_call.1} parent=1 // pred_check_branch
      %440 = sbr.rel (0) target = $region57
    $region56: #{tpu_custom_call.1} parent=1 // pred_region
      %441 = dma.done [#allocation4], 128
    $region57: #{tpu_custom_call.1} parent=1 // pred_fallthru
      _
    // Predicated region
    $region58: #{tpu_custom_call.1} parent=1 // pred_check
      _
    $region59: #{tpu_custom_call.1} parent=1 // pred_check_branch
      %443 = sbr.rel (0) target = $region61
    $region60: #{tpu_custom_call.1} parent=1 // pred_region
      %444 = dma.done [#allocation12], 128
    $region61: #{tpu_custom_call.1} parent=1 // pred_fallthru
      _
    %445 = vsyncpa [#allocation3], 1
    %446 = vsyncpa [#allocation6], 1
    %447 = vsyncpa [#allocation9], 1
    %448 = vsyncpa [#allocation4], 1
    %449 = vsyncpa [#allocation12], 1

</llo_original>
